<compile_context>
chip_gen: v7x
topology: tpu7x:2x2x1
jax: 0.10.0
libtpu: 0.0.40
codegen_flags: <defaults>
</compile_context>

<pallas_src>
import math
import functools

import jax
import jax.numpy as jnp
from jax.experimental import pallas as pl
from jax.experimental.pallas import tpu as pltpu

BACKOFF_PROB = 1e-10


def _round_up(a, b):
    return ((a + b - 1) // b) * b


def _softplus(x):
    # PyTorch BCEWithLogits stable form: max(x, 0) + log1p(exp(-|x|))
    return jnp.maximum(x, 0.0) + jnp.log1p(jnp.exp(-jnp.abs(x)))


def _nce_kernel(nvalid_ref, x_ref, tgt_ref, nembT_ref, nconst_ref, o_ref, *, tm):
    """One (row-tile i, K-chunk k) grid step.

    nvalid_ref : (1,)       SMEM scalar, number of valid rows (B*L)
    x_ref      : (tm, E)    activations (compute dtype)
    tgt_ref    : (tm, 1)    pre-folded target logit_true (f32)
    nembT_ref  : (E, tkk)   emb[noise].T chunk (compute dtype)
    nconst_ref : (1, tkk)   pre-folded per-noise constants (f32)
    o_ref      : (1, 8, 128) per-row-tile partial loss sum (f32), resident across k
    """
    i = pl.program_id(0)
    k = pl.program_id(1)

    @pl.when(k == 0)
    def _():
        o_ref[...] = jnp.zeros_like(o_ref)

    # noise logits for this K chunk: x @ emb[noise].T + (bias - logP_noise - lnZ - log k)
    xn = (jnp.dot(x_ref[...], nembT_ref[...], preferred_element_type=jnp.float32)
          + nconst_ref[...])                                          # (tm, tkk) f32

    # BCE-with-logits, label = 0 for every noise column
    per_row = jnp.sum(_softplus(xn), axis=-1, keepdims=True)          # (tm, 1)

    # target column (label = 1): softplus(-logit_true_target), added once per row tile
    per_row = per_row + jnp.where(k == 0, _softplus(-tgt_ref[...]), 0.0)

    # mask rows past n_valid (covers a partial last row tile; the mask sits after the
    # softplus/sum and before the accumulation, so undefined tail data never leaks —
    # jnp.where does not propagate NaN/inf from the unselected branch)
    row = i * tm + jax.lax.broadcasted_iota(jnp.int32, (tm, 1), 0)
    per_row = jnp.where(row < nvalid_ref[0], per_row, 0.0)

    # per-tile partial sum, broadcast into the lane-dense (8, 128) output block
    o_ref[...] += jnp.sum(per_row)


def nce_loss_pallas(target, x, emb_w, bias_w, logprob_noise, noise_samples,
                    noise_norm, num_sampled, *, tm=512, k_chunk=2048,
                    compute_dtype=jnp.bfloat16):
    """target: (B,L) int32, x: (B,L,E), emb_w: (V,E), bias_w: (V,)."""
    B, L = target.shape
    E = x.shape[-1]
    N = B * L
    K = int(noise_samples.shape[0])
    log_k = math.log(num_sampled)
    dt = jnp.dtype(compute_dtype) if compute_dtype is not None else jnp.dtype(x.dtype)
    itemsize = dt.itemsize

    # ---- tiling -------------------------------------------------------------
    # Row tile: large to amortize per-grid-step overhead; multiple of 8 sublanes;
    # clamped so tiny inputs do not allocate oversized blocks.
    tm = max(8, min(tm, _round_up(N, 8)))
    G = pl.cdiv(N, tm)
    # K tile: single chunk unless K is large and cleanly divisible (avoids column masks).
    tkk = k_chunk if (K > k_chunk and K % k_chunk == 0) else K
    Kg = K // tkk

    # ---- glue (plain JAX) ---------------------------------------------------
    xf = x.reshape(N, E).astype(dt)                                   # (N, E)
    tflat = target.reshape(N)

    # target logit_true = x . emb[tgt] + bias[tgt] - logP_noise[tgt] - lnZ - log k
    # computed as one fused XLA gather + dot in f32 (removes the previous emb[target]
    # (N,E) materialization + kernel re-read through HBM).
    tgt_logit = (jnp.sum(x.reshape(N, E).astype(jnp.float32)
                         * emb_w[tflat].astype(jnp.float32), axis=-1)
                 + bias_w[tflat] - logprob_noise[tflat] - noise_norm - log_k
                 ).astype(jnp.float32).reshape(N, 1)                  # (N, 1)

    nembT = emb_w[noise_samples].T.astype(dt)                         # (E, K)
    nconst = (bias_w[noise_samples] - logprob_noise[noise_samples]
              - noise_norm - log_k).astype(jnp.float32).reshape(1, K)  # (1, K)

    nvalid = jnp.full((1,), N, dtype=jnp.int32)                       # SMEM scalar

    # ---- specs --------------------------------------------------------------
    # Single-buffer the noise block once it is grid-invariant and large enough that the
    # duplicate pipeline buffer is real VMEM (matters on v7x's 64 MiB/TC).
    noise_kw = {}
    noise_bufs = 2
    if Kg == 1 and E * tkk * itemsize > (2 << 20):
        noise_kw = dict(pipeline_mode=pl.Buffered(1))
        noise_bufs = 1

    in_specs = [
        pl.BlockSpec((tm, E), lambda i, k, nv: (i, 0)),               # x rows
        pl.BlockSpec((tm, 1), lambda i, k, nv: (i, 0)),               # target logit_true
        pl.BlockSpec((E, tkk), lambda i, k, nv: (0, k), **noise_kw),  # emb[noise].T chunk
        pl.BlockSpec((1, tkk), lambda i, k, nv: (0, k), **noise_kw),  # folded noise consts
    ]
    out_spec = pl.BlockSpec((1, 8, 128), lambda i, k, nv: (i, 0, 0))  # per-tile partials

    # VMEM budget from actual tile footprint (+ headroom); never the whole v7x 64 MiB.
    vmem_need = (2 * (tm * E * itemsize + tm * 4)
                 + noise_bufs * (E * tkk * itemsize + tkk * 4)
                 + 2 * 8 * 128 * 4)
    vmem_limit = int(min(48 << 20, max(16 << 20, 2 * vmem_need)))

    cost = pl.CostEstimate(
        flops=2 * N * E * K,
        transcendentals=2 * N * (K + 1),
        bytes_accessed=int(N * E * itemsize + E * K * itemsize
                           + N * 4 + K * 4 + G * 8 * 128 * 4),
    )

    partials = pl.pallas_call(
        functools.partial(_nce_kernel, tm=tm),
        out_shape=jax.ShapeDtypeStruct((G, 8, 128), jnp.float32),
        grid_spec=pltpu.PrefetchScalarGridSpec(
            num_scalar_prefetch=1,
            grid=(G, Kg),
            in_specs=in_specs,
            out_specs=out_spec,
        ),
        compiler_params=pltpu.CompilerParams(
            # row tiles are independent -> 'parallel' (both v7x TensorCores get work);
            # the K axis accumulates into the resident output block -> 'arbitrary'.
            dimension_semantics=("parallel", "arbitrary"),
            vmem_limit_bytes=vmem_limit,
        ),
        cost_estimate=cost,
    )(nvalid, xf, tgt_logit, nembT, nconst)

    # reduction='ElementWiseMean' over the B*L targets
    return partials[:, 0, 0].sum() / N


def nce_loss_ref(target, x, emb_w, bias_w, logprob_noise, noise_samples,
                 noise_norm, num_sampled):
    """Pure-JAX reference mirroring the PyTorch module (batched, NCELoss, training)."""
    B, L = target.shape
    E = x.shape[-1]
    xf = x.reshape(-1, E).astype(jnp.float32)
    tflat = target.reshape(-1)
    tgt_score = jnp.sum(xf * emb_w[tflat], axis=1) + bias_w[tflat] - noise_norm
    noise_score = (jnp.dot(xf, emb_w[noise_samples].T,
                           precision=jax.lax.Precision.HIGHEST)
                   + bias_w[noise_samples][None, :] - noise_norm)
    logit_model = jnp.concatenate([tgt_score[:, None], noise_score], axis=1)
    logit_noise = jnp.concatenate(
        [logprob_noise[tflat][:, None],
         jnp.broadcast_to(logprob_noise[noise_samples][None, :],
                          noise_score.shape)], axis=1)
    logit_true = logit_model - logit_noise - math.log(num_sampled)
    label = jnp.zeros_like(logit_true).at[:, 0].set(1.0)
    bce = (jnp.maximum(logit_true, 0) - logit_true * label
           + jnp.log1p(jnp.exp(-jnp.abs(logit_true))))
    return bce.sum(axis=1).reshape(B, L).mean()


if __name__ == "__main__":
    # batch, seq, embed, vocab, num_sampled (lane-dense E and K)
    B, L, E, V, K = 2, 8, 128, 512, 128

    key = jax.random.PRNGKey(0)
    k_noise, k_emb, k_x, k_tgt, k_samp = jax.random.split(key, 5)

    # noise distribution (deterministic, like unigram counts)
    noise = jnp.arange(1, V + 1, dtype=jnp.float32)
    probs = noise / noise.sum()
    probs = jnp.clip(probs, BACKOFF_PROB)          # clamp(min=BACKOFF_PROB)
    probs = probs / probs.sum()
    logprob_noise = jnp.log(probs)
    noise_norm = math.log(V)                       # default noise_norm == -1 -> log(V)

    # parameters (reset_parameters semantics)
    stdv = 1.0 / math.sqrt(E)
    emb_w = jax.random.uniform(k_emb, (V, E), jnp.float32, -stdv, stdv)
    bias_w = logprob_noise + noise_norm            # bias.weight = logprob_noise + lnZ

    # inputs
    x = jax.random.normal(k_x, (B, L, E), jnp.float32)
    target = jax.random.randint(k_tgt, (B, L), 0, V, dtype=jnp.int32)

    # noise samples shared across (B, L) (per_word=False, batched variant)
    noise_samples = jax.random.categorical(k_samp, logprob_noise,
                                           shape=(K,)).astype(jnp.int32)

    loss = nce_loss_pallas(target, x, emb_w, bias_w, logprob_noise,
                           noise_samples, noise_norm, K)
    loss = jax.block_until_ready(loss)

    ref = nce_loss_ref(target, x, emb_w, bias_w, logprob_noise,
                       noise_samples, noise_norm, K)

    # tolerance covers the bf16 operand streams / MXU matmul vs the f32
    # HIGHEST-precision XLA reference; loss is O(5-10), so formula errors still trip it.
    assert jnp.allclose(loss, ref, rtol=2e-2, atol=2e-2), (loss, ref)

    print("KERNEL_OK")
</pallas_src>

<mosaic_0001>
module attributes {stable_mosaic.version = 11 : i64} {
  func.func @_nce_kernel(%arg0: i32, %arg1: i32, %arg2: memref<1xi32, #tpu.memory_space<smem>>, %arg3: memref<16x128xbf16, #tpu.memory_space<vmem>>, %arg4: memref<16x1xf32, #tpu.memory_space<vmem>>, %arg5: memref<128x128xbf16, #tpu.memory_space<vmem>>, %arg6: memref<1x128xf32, #tpu.memory_space<vmem>>, %arg7: memref<1x8x128xf32, #tpu.memory_space<vmem>>) attributes {dimension_semantics = [#tpu.dimension_semantics<parallel>, #tpu.dimension_semantics<arbitrary>], iteration_bounds = array<i64: 1, 1>, scalar_prefetch = 1 : i64, scratch_operands = 0 : i64, tpu.core_type = #tpu.core_type<tc>, window_params = [{transform_indices = @transform_0, window_bounds = array<i64: 16, 128>}, {transform_indices = @transform_1, window_bounds = array<i64: 16, 1>}, {transform_indices = @transform_2, window_bounds = array<i64: 128, 128>}, {transform_indices = @transform_3, window_bounds = array<i64: 1, 128>}, {transform_indices = @transform_4, window_bounds = array<i64: 1, 8, 128>}]} {
    %c0_i32 = arith.constant 0 : i32
    %0 = arith.cmpi eq, %arg1, %c0_i32 : i32
    %1 = arith.extui %0 : i1 to i32
    %c0_i32_0 = arith.constant 0 : i32
    %2 = arith.cmpi ne, %1, %c0_i32_0 : i32
    scf.if %2 {
      %cst_25 = arith.constant 0.000000e+00 : f32
      %51 = vector.broadcast %cst_25 : f32 to vector<1x8x128xf32>
      %c0_26 = arith.constant 0 : index
      %c0_27 = arith.constant 0 : index
      %c0_28 = arith.constant 0 : index
      %52 = vector.load %arg7[%c0_26, %c0_27, %c0_28] : memref<1x8x128xf32, #tpu.memory_space<vmem>>, vector<1x8x128xf32>
      tpu.vector_store %arg7[%c0_26, %c0_27, %c0_28], %51 {strides = array<i32>} : memref<1x8x128xf32, #tpu.memory_space<vmem>>, vector<1x8x128xf32>,
    } else {
    }
    %c0 = arith.constant 0 : index
    %c0_1 = arith.constant 0 : index
    %3 = vector.load %arg3[%c0, %c0_1] : memref<16x128xbf16, #tpu.memory_space<vmem>>, vector<16x128xbf16>
    %c0_2 = arith.constant 0 : index
    %c0_3 = arith.constant 0 : index
    %4 = vector.load %arg5[%c0_2, %c0_3] : memref<128x128xbf16, #tpu.memory_space<vmem>>, vector<128x128xbf16>
    %cst = arith.constant dense<0.000000e+00> : vector<16x128xf32>
    %5 = tpu.matmul %3, %4, %cst {dimension_numbers = #tpu.dot_dimension_numbers<[1], [0], [0], [1], [0, 0, 1, 1], [], []>} : vector<16x128xbf16>, vector<128x128xbf16>, vector<16x128xf32> -> vector<16x128xf32>
    %c0_4 = arith.constant 0 : index
    %c0_5 = arith.constant 0 : index
    %6 = vector.load %arg6[%c0_4, %c0_5] : memref<1x128xf32, #tpu.memory_space<vmem>>, vector<1x128xf32>
    %7 = vector.broadcast %6 : vector<1x128xf32> to vector<16x128xf32>
    %8 = arith.addf %5, %7 : vector<16x128xf32>
    %cst_6 = arith.constant 0.000000e+00 : f32
    %9 = vector.broadcast %cst_6 : f32 to vector<16x128xf32>
    %10 = arith.maximumf %8, %9 : vector<16x128xf32>
    %11 = math.absf %8 : vector<16x128xf32>
    %cst_7 = arith.constant 0.000000e+00 : f32
    %12 = vector.broadcast %cst_7 : f32 to vector<16x128xf32>
    %13 = arith.subf %12, %11 : vector<16x128xf32>
    %14 = math.exp %13 : vector<16x128xf32>
    %15 = math.log1p %14 : vector<16x128xf32>
    %16 = arith.addf %10, %15 : vector<16x128xf32>
    %cst_8 = arith.constant dense<0.000000e+00> : vector<16xf32>
    %17 = vector.multi_reduction <add>, %16, %cst_8 [1] : vector<16x128xf32> to vector<16xf32>
    %18 = vector.shape_cast %17 : vector<16xf32> to vector<16x1xf32>
    %c0_i32_9 = arith.constant 0 : i32
    %19 = arith.cmpi eq, %arg1, %c0_i32_9 : i32
    %c0_10 = arith.constant 0 : index
    %c0_11 = arith.constant 0 : index
    %20 = vector.load %arg4[%c0_10, %c0_11] : memref<16x1xf32, #tpu.memory_space<vmem>>, vector<16x1xf32>
    %cst_12 = arith.constant 0.000000e+00 : f32
    %21 = vector.broadcast %cst_12 : f32 to vector<16x1xf32>
    %22 = arith.subf %21, %20 : vector<16x1xf32>
    %cst_13 = arith.constant 0.000000e+00 : f32
    %23 = vector.broadcast %cst_13 : f32 to vector<16x1xf32>
    %24 = arith.maximumf %22, %23 : vector<16x1xf32>
    %25 = math.absf %22 : vector<16x1xf32>
    %cst_14 = arith.constant 0.000000e+00 : f32
    %26 = vector.broadcast %cst_14 : f32 to vector<16x1xf32>
    %27 = arith.subf %26, %25 : vector<16x1xf32>
    %28 = math.exp %27 : vector<16x1xf32>
    %29 = math.log1p %28 : vector<16x1xf32>
    %30 = arith.addf %24, %29 : vector<16x1xf32>
    %cst_15 = arith.constant 0.000000e+00 : f32
    %31 = vector.broadcast %cst_15 : f32 to vector<16x1xf32>
    %32 = arith.select %19, %30, %31 : vector<16x1xf32>
    %33 = arith.addf %18, %32 : vector<16x1xf32>
    %c16_i32 = arith.constant 16 : i32
    %34 = arith.muli %arg0, %c16_i32 : i32
    %35 = tpu.iota {dimensions = array<i32: 0>} : vector<16x1xi32>
    %36 = vector.broadcast %34 : i32 to vector<16x1xi32>
    %37 = arith.addi %36, %35 : vector<16x1xi32>
    %c0_16 = arith.constant 0 : index
    %38 = memref.load %arg2[%c0_16] : memref<1xi32, #tpu.memory_space<smem>>
    %39 = vector.broadcast %38 : i32 to vector<16x1xi32>
    %40 = arith.cmpi slt, %37, %39 : vector<16x1xi32>
    %cst_17 = arith.constant 0.000000e+00 : f32
    %41 = vector.broadcast %cst_17 : f32 to vector<16x1xf32>
    %42 = arith.select %40, %33, %41 : vector<16x1xi1>, vector<16x1xf32>
    %c0_18 = arith.constant 0 : index
    %c0_19 = arith.constant 0 : index
    %c0_20 = arith.constant 0 : index
    %43 = vector.load %arg7[%c0_18, %c0_19, %c0_20] : memref<1x8x128xf32, #tpu.memory_space<vmem>>, vector<1x8x128xf32>
    %44 = vector.shape_cast %42 : vector<16x1xf32> to vector<1x16x1xf32>
    %cst_21 = arith.constant dense<0.000000e+00> : vector<1xf32>
    %45 = vector.multi_reduction <add>, %44, %cst_21 [1, 2] : vector<1x16x1xf32> to vector<1xf32>
    %46 = vector.shape_cast %45 : vector<1xf32> to vector<1x1x1xf32>
    %47 = vector.extract %46[0, 0, 0] : f32 from vector<1x1x1xf32>
    %48 = vector.broadcast %47 : f32 to vector<1x8x128xf32>
    %49 = arith.addf %43, %48 : vector<1x8x128xf32>
    %c0_22 = arith.constant 0 : index
    %c0_23 = arith.constant 0 : index
    %c0_24 = arith.constant 0 : index
    %50 = vector.load %arg7[%c0_22, %c0_23, %c0_24] : memref<1x8x128xf32, #tpu.memory_space<vmem>>, vector<1x8x128xf32>
    tpu.vector_store %arg7[%c0_22, %c0_23, %c0_24], %49 {strides = array<i32>} : memref<1x8x128xf32, #tpu.memory_space<vmem>>, vector<1x8x128xf32>,
    return
  }
  func.func @transform_0(%arg0: i32, %arg1: i32, %arg2: memref<1xi32, #tpu.memory_space<smem>>) -> (i32, i32) {
    %c0_i32 = arith.constant 0 : i32
    %c0_i32_0 = arith.constant 0 : i32
    return %arg0, %c0_i32 : i32, i32
  }
  func.func @transform_1(%arg0: i32, %arg1: i32, %arg2: memref<1xi32, #tpu.memory_space<smem>>) -> (i32, i32) {
    %c0_i32 = arith.constant 0 : i32
    %c0_i32_0 = arith.constant 0 : i32
    return %arg0, %c0_i32 : i32, i32
  }
  func.func @transform_2(%arg0: i32, %arg1: i32, %arg2: memref<1xi32, #tpu.memory_space<smem>>) -> (i32, i32) {
    %c0_i32 = arith.constant 0 : i32
    %c0_i32_0 = arith.constant 0 : i32
    return %c0_i32, %arg1 : i32, i32
  }
  func.func @transform_3(%arg0: i32, %arg1: i32, %arg2: memref<1xi32, #tpu.memory_space<smem>>) -> (i32, i32) {
    %c0_i32 = arith.constant 0 : i32
    %c0_i32_0 = arith.constant 0 : i32
    return %c0_i32, %arg1 : i32, i32
  }
  func.func @transform_4(%arg0: i32, %arg1: i32, %arg2: memref<1xi32, #tpu.memory_space<smem>>) -> (i32, i32, i32) {
    %c0_i32 = arith.constant 0 : i32
    %c0_i32_0 = arith.constant 0 : i32
    %c0_i32_1 = arith.constant 0 : i32
    return %arg0, %c0_i32, %c0_i32_0 : i32, i32, i32
  }
}

</mosaic_0001>

<llo_original>
// kernel: tpu_custom_call.1
$region0: #{tpu_custom_call.1}
  #allocation0 [shape = 'u32[]', space=smem, size = 0x4, offset = 0x4, fixed_abs, tag = 'smem constant byte address 0x4 - core index']
  #allocation1 [shape = 'u32[144,128]{1,0:T(1,128)}', space=vmem, size = 0x12000, scoped, tag = 'internal scratch']
  #allocation2 [shape = 's32[1]{0}', space=sflag, size = 0x4, scoped, tag = 'scoped memory for tpu_custom_call.1']
  #allocation3 [shape = 's32[1]{0:T(128)S(6)}', space=smem, size = 0x200, scoped, tag = 'prefetched SMEM operand 0']
  %s0 = inlined_call_operand.<no memory space> [shape: s32[1], index: 0, kind: input, shape index: {}]
  %s1 = inlined_call_operand.vmem [shape: bf16[16,128], index: 1, kind: input, shape index: {}]
  %s2 = inlined_call_operand.vmem [shape: f32[16,1], index: 2, kind: input, shape index: {}]
  %s3 = inlined_call_operand.hbm [shape: bf16[128,128], index: 3, kind: input, shape index: {}]
  %s4 = inlined_call_operand.vmem [shape: f32[1,128], index: 4, kind: input, shape index: {}]
  %s5 = inlined_call_operand.hbm [shape: f32[1,8,128], index: 5, kind: output, shape index: {}]
  %s6 = sld [smem:[#allocation0]]
  $region34: #{tpu_custom_call.1} parent=0
    _
  %s8 = ssub.s32 1, %s6
  %s9 = scalar_select 0, %s8, %s6
  %10 = sst [smem:[#allocation3]] %s0
  $region1: #{tpu_custom_call.1} parent=0
    #allocation4 [shape = 'u8[32768]{0}', space=vmem, size = 0x8000, scoped, tag = 'input window, operand 3, single buffered']
    #allocation5 [shape = 's32[1]{0}', space=sflag, size = 0x4, scoped, tag = 'scoped memory for tpu_custom_call.1']
    #allocation6 [shape = 's32[1]{0}', space=sflag, size = 0x4, scoped, tag = 'scoped memory for tpu_custom_call.1']
    #allocation7 [shape = 'u8[4096]{0}', space=vmem, size = 0x1000, scoped, tag = 'output window, operand 0, single buffered']
    %11 = vsyncpa [#allocation5], 0
    %12 = vsyncpa [#allocation6], 0
    // Predicated region
    $region2: #{tpu_custom_call.1} parent=1 // pred_check
      _
    $region3: #{tpu_custom_call.1} parent=1 // pred_check_branch
      %14 = sbr.rel (0) target = $region5
    $region4: #{tpu_custom_call.1} parent=1 // pred_region
      _
    $region5: #{tpu_custom_call.1} parent=1 // pred_fallthru
      _
    // Predicated region
    $region6: #{tpu_custom_call.1} parent=1 // pred_check
      _
    $region7: #{tpu_custom_call.1} parent=1 // pred_check_branch
      %16 = sbr.rel (0) target = $region9
    $region8: #{tpu_custom_call.1} parent=1 // pred_region
      _
    $region9: #{tpu_custom_call.1} parent=1 // pred_fallthru
      _
    // Predicated region
    $region10: #{tpu_custom_call.1} parent=1 // pred_check
      _
    $region11: #{tpu_custom_call.1} parent=1 // pred_check_branch
      %18 = sbr.rel (0) target = $region13
    $region12: #{tpu_custom_call.1} parent=1 // pred_region
      %s20 = ssub.s32 1024, 1024
      %21 = vsyncadd [#allocation5], %s20
      %s22 = sshll.u32 [#allocation4], 4
      %s23 = int_to_ptr.vmem [resolvable:$true] %s22
      %28 = dma.hbm_to_vmem [thread:$0]  %s3, 1024, %s23, [#allocation5], 64, 64, 4
    $region13: #{tpu_custom_call.1} parent=1 // pred_fallthru
      _
    // Predicated region
    $region14: #{tpu_custom_call.1} parent=1 // pred_check
      _
    $region15: #{tpu_custom_call.1} parent=1 // pred_check_branch
      %30 = sbr.rel (0) target = $region17
    $region16: #{tpu_custom_call.1} parent=1 // pred_region
      _
    $region17: #{tpu_custom_call.1} parent=1 // pred_fallthru
      _
    // Predicated region
    $region18: #{tpu_custom_call.1} parent=1 // pred_check
      _
    $region19: #{tpu_custom_call.1} parent=1 // pred_check_branch
      %32 = sbr.rel (0) target = $region21
    $region20: #{tpu_custom_call.1} parent=1 // pred_region
      %33 = dma.done [#allocation5], 1024
    $region21: #{tpu_custom_call.1} parent=1 // pred_fallthru
      _
    %p35 = scmp.eq.s32.totalorder 0, 0
    // Predicated region
    $region22: #{tpu_custom_call.1} parent=1 // pred_check
      %p36 = pneg %p35
    $region23: #{tpu_custom_call.1} parent=1 // pred_check_branch
      %38 = sbr.rel (%p36) target = $region25
    $region24: #{tpu_custom_call.1} parent=1 // pred_region
      %39 = vst [vmem:[#allocation7] sm:$0xff] 0.0
    $region25: #{tpu_custom_call.1} parent=1 // pred_fallthru
      _
    %v40 = vld [vmem:[%s1] sm:$0xf]
    %v41 = vld [vmem:[%s1 + $0x4] sm:$0xf]
    %v42 = vld [vmem:[#allocation4] sm:$0xf]
    %v43 = vld [vmem:[#allocation4 + $0x4] sm:$0xf]
    %v44 = vld [vmem:[#allocation4 + $0x8] sm:$0xf]
    %v45 = vld [vmem:[#allocation4 + $0xc] sm:$0xf]
    %v46 = vld [vmem:[#allocation4 + $0x10] sm:$0xf]
    %v47 = vld [vmem:[#allocation4 + $0x14] sm:$0xf]
    %v48 = vld [vmem:[#allocation4 + $0x18] sm:$0xf]
    %v49 = vld [vmem:[#allocation4 + $0x1c] sm:$0xf]
    %v50 = vld [vmem:[#allocation4 + $0x20] sm:$0xf]
    %v51 = vld [vmem:[#allocation4 + $0x24] sm:$0xf]
    %v52 = vld [vmem:[#allocation4 + $0x28] sm:$0xf]
    %v53 = vld [vmem:[#allocation4 + $0x2c] sm:$0xf]
    %v54 = vld [vmem:[#allocation4 + $0x30] sm:$0xf]
    %v55 = vld [vmem:[#allocation4 + $0x34] sm:$0xf]
    %v56 = vld [vmem:[#allocation4 + $0x38] sm:$0xf]
    %v57 = vld [vmem:[#allocation4 + $0x3c] sm:$0xf]
    %v58 = vld [vmem:[%s4] sm:$0x1]
    %v60 = vlaneseq
    %v61 = vshrl.u32 %v60, 7
    %v62 = vsub.s32 0, %v61
    %v63 = vrot.slane %v58, %v62
    %v67 = vunpack.c.l.b16 %v40
    %v68 = vunpack.c.l.b16 %v41
    %v69 = vpack.c.b16 %v68, %v67
    %v87 = vunpack.c.l.b16 %v42
    %v88 = vunpack.c.l.b16 %v43
    %v89 = vunpack.c.l.b16 %v44
    %v90 = vunpack.c.l.b16 %v45
    %v91 = vunpack.c.l.b16 %v46
    %v92 = vunpack.c.l.b16 %v47
    %v93 = vunpack.c.l.b16 %v48
    %v94 = vunpack.c.l.b16 %v49
    %v95 = vunpack.c.l.b16 %v50
    %v96 = vunpack.c.l.b16 %v51
    %v97 = vunpack.c.l.b16 %v52
    %v98 = vunpack.c.l.b16 %v53
    %v99 = vunpack.c.l.b16 %v54
    %v100 = vunpack.c.l.b16 %v55
    %v101 = vunpack.c.l.b16 %v56
    %v102 = vunpack.c.l.b16 %v57
    %v103 = vpack.c.b16 %v88, %v87
    %v104 = vpack.c.b16 %v90, %v89
    %v105 = vpack.c.b16 %v92, %v91
    %v106 = vpack.c.b16 %v94, %v93
    %v107 = vpack.c.b16 %v96, %v95
    %v108 = vpack.c.b16 %v98, %v97
    %v109 = vpack.c.b16 %v100, %v99
    %v110 = vpack.c.b16 %v102, %v101
    %119 = vmatprep.subr.bf16.mxu0 0
    %120 = vmatpush1.bf16.msra.mxu0 %v103
    %121 = vmatprep.subr.bf16.mxu0 0
    %122 = vmatpush1.bf16.msra.mxu0 %v104
    %123 = vmatprep.subr.bf16.mxu0 0
    %124 = vmatpush1.bf16.msra.mxu0 %v105
    %125 = vmatprep.subr.bf16.mxu0 0
    %126 = vmatpush1.bf16.msra.mxu0 %v106
    %127 = vmatprep.subr.bf16.mxu0 0
    %128 = vmatpush1.bf16.msra.mxu0 %v107
    %129 = vmatprep.subr.bf16.mxu0 0
    %130 = vmatpush1.bf16.msra.mxu0 %v108
    %131 = vmatprep.subr.bf16.mxu0 0
    %132 = vmatpush1.bf16.msra.mxu0 %v109
    %133 = vmatprep.subr.bf16.mxu0 0
    %134 = vmatpush1.bf16.msra.mxu0 %v110
    %135 = vmatprep.subr.bf16.mxu0 0
    %136 = vmatpush1.bf16.msra.mxu0 0
    %137 = vmatprep.subr.bf16.mxu0 0
    %138 = vmatpush1.bf16.msra.mxu0 0
    %139 = vmatprep.subr.bf16.mxu0 0
    %140 = vmatpush1.bf16.msra.mxu0 0
    %141 = vmatprep.subr.bf16.mxu0 0
    %142 = vmatpush1.bf16.msra.mxu0 0
    %143 = vmatprep.subr.bf16.mxu0 0
    %144 = vmatpush1.bf16.msra.mxu0 0
    %145 = vmatprep.subr.bf16.mxu0 0
    %146 = vmatpush1.bf16.msra.mxu0 0
    %147 = vmatprep.subr.bf16.mxu0 0
    %148 = vmatpush1.bf16.msra.mxu0 0
    %149 = vmatprep.subr.bf16.mxu0 0
    %150 = vmatpush1.bf16.msra.mxu0 0
    %151 = vmatprep.mubr.bf16.mxu0 0
    %152 = vmatmul.mubr.bf16.gmra.mrb[0].mxu0 %v69
    %v153 = vpop.f32.mrb[0].mxu0
    %v154 = vadd.f32 %v63, %v153
    %v155 = vpop.f32.mrb[0].mxu0
    %v156 = vpop.f32.mrb[0].mxu0
    %v157 = vadd.f32 %v63, %v156
    %v158 = vpop.f32.mrb[0].mxu0
    %159 = vdwg.mxu0
    %v160 = vmax.f32 %v154, 0.0
    %v161 = vmax.f32 %v157, 0.0
    %v162 = vand.u32 2147483647, %v154
    %v163 = vand.u32 2147483647, %v157
    %v164 = vsub.f32 0.0, %v162
    %v165 = vsub.f32 0.0, %v163
    %v166 = vmul.f32 %v164, 1.442695
    %v167 = vpow.pop %v166
    %v168 = vmul.f32 %v165, 1.442695
    %v169 = vpow.pop %v168
    %v170 = vadd.f32 %v167, 1.0
    %v171 = vlog2.pop %v170
    %v172 = vmul.f32 %v171, 0.6931472
    %v173 = vmul.f32 -0.5, %v167
    %v174 = vadd.f32 %v173, 1.0
    %v175 = vmul.f32 %v174, %v167
    %v176 = vand.u32 2147483647, %v167
    %vm177 = vcmp.lt.f32.partialorder %v176, 0.0004427343
    %v178 = vsel %vm177, %v175, %v172
    %v179 = vadd.f32 %v169, 1.0
    %v180 = vlog2.pop %v179
    %v181 = vmul.f32 %v180, 0.6931472
    %v182 = vmul.f32 -0.5, %v169
    %v183 = vadd.f32 %v182, 1.0
    %v184 = vmul.f32 %v183, %v169
    %v185 = vand.u32 2147483647, %v169
    %vm186 = vcmp.lt.f32.partialorder %v185, 0.0004427343
    %v187 = vsel %vm186, %v184, %v181
    %v188 = vadd.f32 %v160, %v178
    %v189 = vadd.f32 %v161, %v187
    %190 = vadd.xlane.f32.xlu0 %v188
    %v191 = vpop.xlane.xlu0 %190
    %192 = vadd.xlane.f32.xlu0 %v189
    %v193 = vpop.xlane.xlu0 %192
    %v194 = vld [vmem:[%s2] sm:$0xff]
    %v195 = vld [vmem:[%s2 + $0x8] sm:$0xff]
    %v196 = vsub.f32 0.0, %v194
    %v197 = vsub.f32 0.0, %v195
    %v198 = vmax.f32 %v196, 0.0
    %v199 = vmax.f32 %v197, 0.0
    %v200 = vand.u32 2147483647, %v196
    %v201 = vand.u32 2147483647, %v197
    %v202 = vsub.f32 0.0, %v200
    %v203 = vsub.f32 0.0, %v201
    %v204 = vmul.f32 %v202, 1.442695
    %v205 = vpow.pop %v204
    %v206 = vmul.f32 %v203, 1.442695
    %v207 = vpow.pop %v206
    %v208 = vadd.f32 %v205, 1.0
    %v209 = vlog2.pop %v208
    %v210 = vmul.f32 %v209, 0.6931472
    %v211 = vmul.f32 -0.5, %v205
    %v212 = vadd.f32 %v211, 1.0
    %v213 = vmul.f32 %v212, %v205
    %v214 = vand.u32 2147483647, %v205
    %vm215 = vcmp.lt.f32.partialorder %v214, 0.0004427343
    %v216 = vsel %vm215, %v213, %v210
    %v217 = vadd.f32 %v207, 1.0
    %v218 = vlog2.pop %v217
    %v219 = vmul.f32 %v218, 0.6931472
    %v220 = vmul.f32 -0.5, %v207
    %v221 = vadd.f32 %v220, 1.0
    %v222 = vmul.f32 %v221, %v207
    %v223 = vand.u32 2147483647, %v207
    %vm224 = vcmp.lt.f32.partialorder %v223, 0.0004427343
    %v225 = vsel %vm224, %v222, %v219
    %v226 = vadd.f32 %v198, %v216
    %v227 = vadd.f32 %v199, %v225
    %s228 = scalar_select %p35, 1, 0
    %v229 = vstv %s228
    %vm230 = vcmp.eq.s32.totalorder %v229, 1
    %v231 = vsel %vm230, %v226, 0.0
    %v232 = vsel %vm230, %v227, 0.0
    %v233 = vadd.f32 %v191, %v231
    %v234 = vadd.f32 %v193, %v232
    %s235 = smul.u32 0, 16
    %v236 = vlaneseq
    %v237 = vshrl.u32 %v236, 7
    %v238 = vadd.s32 %v237, 8
    %v239 = vstv %s235
    %v240 = vadd.s32 %v239, %v237
    %v241 = vadd.s32 %v239, %v238
    %s242 = sld [smem:[#allocation3]]
    %v243 = vstv %s242
    %vm244 = vcmp.lt.s32.totalorder %v240, %v243
    %vm245 = vcmp.lt.s32.totalorder %v241, %v243
    %v246 = vsel %vm244, %v233, 0.0
    %v247 = vsel %vm245, %v234, 0.0
    %v248 = vld [vmem:[#allocation7] sm:$0xff]
    %vm249 = vcmask 7168
    %v250 = vsel %vm249, %v246, 0.0
    %v251 = vsel %vm249, %v247, 0.0
    %v252 = vadd.f32 %v250, %v251
    %253 = vadd.xlane.f32.xlu0 %v252
    %v254 = vpop.xlane.xlu0 %253
    %v255 = vrot.slane %v254, 4
    %v256 = vadd.f32 %v254, %v255
    %v257 = vrot.slane %v256, 2
    %v258 = vadd.f32 %v256, %v257
    %v259 = vrot.slane %v258, 1
    %v260 = vadd.f32 %v258, %v259
    %s261 = vtos %v260
    %v262 = vstv %s261
    %v263 = vadd.f32 %v248, %v262
    %264 = vst [vmem:[#allocation7] sm:$0xff] %v263
    // Predicated region
    $region26: #{tpu_custom_call.1} parent=1 // pred_check
      _
    $region27: #{tpu_custom_call.1} parent=1 // pred_check_branch
      %266 = sbr.rel (0) target = $region29
    $region28: #{tpu_custom_call.1} parent=1 // pred_region
      %s268 = ssub.s32 128, 128
      %269 = vsyncadd [#allocation6], %s268
      %s271 = sshll.u32 [#allocation7], 4
      %s272 = int_to_ptr.vmem [resolvable:$true] %s271
      %274 = dma.vmem_to_hbm [thread:$0]  %s272, 128, %s5, [#allocation6]
    $region29: #{tpu_custom_call.1} parent=1 // pred_fallthru
      _
    // Predicated region
    $region30: #{tpu_custom_call.1} parent=1 // pred_check
      _
    $region31: #{tpu_custom_call.1} parent=1 // pred_check_branch
      %276 = sbr.rel (0) target = $region33
    $region32: #{tpu_custom_call.1} parent=1 // pred_region
      %277 = dma.done [#allocation6], 128
    $region33: #{tpu_custom_call.1} parent=1 // pred_fallthru
      _
    %278 = vsyncpa [#allocation5], 1
    %279 = vsyncpa [#allocation6], 1

</llo_original>
